<compile_context>
chip_gen: v6e
topology: v6e:2x2x1
jax: 0.10.0
libtpu: 0.0.40
codegen_flags: <defaults>
</compile_context>

<pallas_src>
import math

import jax
import jax.numpy as jnp
from jax.experimental import pallas as pl
from jax.experimental.pallas import tpu as pltpu

BN_EPS = 1e-5
_LANE = 128  # TPU lane width


def _conv1d_bn_gelu_kernel(x_ref, w_ref, b_ref, o_ref):
    # x_ref: (1, C_in, TL)   input tile, L lane-dense (native NCL layout)
    # w_ref: (C_out, C_in)   BN-folded pointwise-conv weight
    # b_ref: (C_out, 1)      BN-folded bias (column -> lane broadcast)
    # o_ref: (1, TL, C_out)  output tile, already in the final (B, L, C_out) layout
    x = x_ref[0]                      # (C_in, TL)
    w = w_ref[...]                    # (C_out, C_in)
    c_in, tl = x.shape
    c_out = w.shape[0]

    if c_in >= 16:
        # MXU path: (C_out, C_in) @ (C_in, TL) -> (C_out, TL), f32 accumulate.
        y = jnp.dot(w, x, preferred_element_type=jnp.float32)
    else:
        # VPU broadcast-MAC: contraction depth is far too small to feed the MXU usefully.
        y = jnp.zeros((c_out, tl), jnp.float32)
        for ci in range(c_in):        # static unroll (c_in is tiny)
            y = y + w[:, ci:ci + 1] * x[ci:ci + 1, :]

    # Folded (conv bias + eval-mode BatchNorm) affine.
    y = y + b_ref[...]

    # Exact GELU (erf), matching nn.GELU() default, computed on the lane-dense (C_out, TL) form.
    y = 0.5 * y * (1.0 + jax.lax.erf(y * (1.0 / math.sqrt(2.0))))

    # Dropout: eval mode -> identity.  # TODO(synk): training-mode dropout (pltpu.prng_*) omitted.

    # Epilogue: (C_out, TL) -> (TL, C_out) so the store lands directly in the PyTorch output
    # layout (single HBM write pass).  Chunk the transpose per 128 lanes to bound vreg pressure.
    y = y.astype(o_ref.dtype)
    if tl % _LANE == 0 and tl > _LANE:
        for j in range(tl // _LANE):
            o_ref[0, j * _LANE:(j + 1) * _LANE, :] = y[:, j * _LANE:(j + 1) * _LANE].T
    else:
        o_ref[0] = y.T


def conv1d_module(x, params, squeeze_output=True, max_tl=512):
    """x: (B, C_in, L) float32.  Returns (B, L, C_out) (squeezed on last dim if C_out==1)."""
    B, C_in, L = x.shape
    w = params["conv_w"].astype(jnp.float32)          # (C_out, C_in)
    C_out = w.shape[0]

    # Fold eval-mode BatchNorm1d (+ conv bias) into a single affine, in f32, eps inside rsqrt.
    scale = params["bn_gamma"] * jax.lax.rsqrt(params["bn_var"] + BN_EPS)   # (C_out,)
    w_f = w * scale[:, None]                                                # (C_out, C_in)
    b_f = (params["conv_b"] - params["bn_mean"]) * scale + params["bn_beta"]
    b_col = b_f.reshape(C_out, 1).astype(jnp.float32)

    # Tile L (the lane dimension).  max_tl must be a multiple of 128 so tiled blocks stay
    # lane-aligned; if L itself is small we take it whole (block == full array dim is legal).
    assert max_tl % _LANE == 0, "max_tl must be a multiple of 128"
    if L <= max_tl:
        TL, L_pad = L, L
    else:
        TL = max_tl
        L_pad = ((L + TL - 1) // TL) * TL
    x_in = x if L_pad == L else jnp.pad(x, ((0, 0), (0, 0), (0, L_pad - L)))

    grid = (B, L_pad // TL)
    out = pl.pallas_call(
        _conv1d_bn_gelu_kernel,
        out_shape=jax.ShapeDtypeStruct((B, L_pad, C_out), x.dtype),
        grid_spec=pltpu.PrefetchScalarGridSpec(
            num_scalar_prefetch=0,
            grid=grid,
            in_specs=[
                pl.BlockSpec((1, C_in, TL), lambda b, l: (b, 0, l)),
                pl.BlockSpec((C_out, C_in), lambda b, l: (0, 0)),   # resident across grid
                pl.BlockSpec((C_out, 1), lambda b, l: (0, 0)),      # resident across grid
            ],
            out_specs=pl.BlockSpec((1, TL, C_out), lambda b, l: (b, l, 0)),
        ),
        compiler_params=pltpu.CompilerParams(
            dimension_semantics=("parallel", "parallel"),
            vmem_limit_bytes=32 * 1024 * 1024,
        ),
        cost_estimate=pl.CostEstimate(
            flops=2 * B * L_pad * C_in * C_out,
            transcendentals=B * L_pad * C_out,
            bytes_accessed=4 * (B * C_in * L_pad + C_in * C_out + C_out + B * L_pad * C_out),
        ),
    )(x_in, w_f, b_col)

    if L_pad != L:
        out = out[:, :L, :]
    if squeeze_output and C_out == 1:
        out = out.squeeze(-1)
    return out


def init_params(key, dim_in, dim_out):
    k1, k2, k3, k4, _ = jax.random.split(key, 5)
    bound = 1.0 / math.sqrt(dim_in)  # PyTorch Conv1d default init range
    return {
        "conv_w": jax.random.uniform(k1, (dim_out, dim_in), jnp.float32, -bound, bound),
        "conv_b": jax.random.uniform(k2, (dim_out,), jnp.float32, -bound, bound),
        "bn_gamma": jnp.ones((dim_out,), jnp.float32),
        "bn_beta": jnp.zeros((dim_out,), jnp.float32),
        # Nontrivial but deterministic running stats so BN actually does something.
        "bn_mean": 0.1 * jax.random.normal(k3, (dim_out,), jnp.float32),
        "bn_var": 1.0 + 0.1 * jax.random.uniform(k4, (dim_out,), jnp.float32),
    }


def _reference(x, p):
    # Pure-JAX reference of the same eval-mode forward (HIGHEST precision so the reference
    # contraction is true f32 regardless of XLA's default TPU matmul policy).
    y = jnp.einsum("bcl,oc->bol", x, p["conv_w"],
                   precision=jax.lax.Precision.HIGHEST) + p["conv_b"][None, :, None]
    y = (y - p["bn_mean"][None, :, None]) / jnp.sqrt(p["bn_var"][None, :, None] + BN_EPS)
    y = y * p["bn_gamma"][None, :, None] + p["bn_beta"][None, :, None]
    y = 0.5 * y * (1.0 + jax.lax.erf(y / math.sqrt(2.0)))
    return jnp.transpose(y, (0, 2, 1))


if __name__ == "__main__":
    key = jax.random.PRNGKey(0)
    # (B, C_in, L, C_out, max_tl, atol/rtol) — exercises:
    #   1) tiny single-tile path + VPU-MAC contraction (module's typical shape),
    #   2) multi-tile grid + L padding + lane-chunked stores (still VPU-MAC),
    #   3) MXU jnp.dot path (C_in >= 16) with chunked epilogue.  Looser tolerance only to absorb
    #      MXU f32 pass-decomposition / accumulation-order differences vs the einsum reference.
    configs = [
        (2, 4, 16, 32, 512, 1e-5),
        (2, 4, 200, 32, 128, 1e-5),
        (2, 128, 256, 128, 512, 2e-3),
    ]
    for (B, C_in, L, C_out, max_tl, tol) in configs:
        kx, kp, key = jax.random.split(key, 3)
        x = jax.random.normal(kx, (B, C_in, L), jnp.float32)
        params = init_params(kp, C_in, C_out)

        out = jax.block_until_ready(conv1d_module(x, params, max_tl=max_tl))
        ref = _reference(x, params)

        assert out.shape == (B, L, C_out), (out.shape, (B, L, C_out))
        err = float(jnp.max(jnp.abs(out - ref)))
        assert jnp.allclose(out, ref, atol=tol, rtol=tol), (
            f"mismatch for config {(B, C_in, L, C_out)}: max abs err = {err}")
    print("KERNEL_OK")
</pallas_src>

<mosaic_0001>
module attributes {stable_mosaic.version = 11 : i64} {
  func.func @_conv1d_bn_gelu_kernel(%arg0: i32, %arg1: i32, %arg2: memref<1x4x16xf32, #tpu.memory_space<vmem>>, %arg3: memref<32x4xf32, #tpu.memory_space<vmem>>, %arg4: memref<32x1xf32, #tpu.memory_space<vmem>>, %arg5: memref<1x16x32xf32, #tpu.memory_space<vmem>>) attributes {dimension_semantics = [#tpu.dimension_semantics<parallel>, #tpu.dimension_semantics<parallel>], iteration_bounds = array<i64: 2, 1>, scalar_prefetch = 0 : i64, scratch_operands = 0 : i64, tpu.core_type = #tpu.core_type<tc>, window_params = [{transform_indices = @transform_0, window_bounds = array<i64: 1, 4, 16>}, {pipeline_mode = #tpu.pipeline_mode<synchronous>, transform_indices = @transform_1, window_bounds = array<i64: 32, 4>}, {pipeline_mode = #tpu.pipeline_mode<synchronous>, transform_indices = @transform_2, window_bounds = array<i64: 32, 1>}, {transform_indices = @transform_3, window_bounds = array<i64: 1, 16, 32>}]} {
    %c0 = arith.constant 0 : index
    %c0_0 = arith.constant 0 : index
    %c0_1 = arith.constant 0 : index
    %0 = vector.load %arg2[%c0, %c0_0, %c0_1] : memref<1x4x16xf32, #tpu.memory_space<vmem>>, vector<1x4x16xf32>
    %1 = vector.shape_cast %0 : vector<1x4x16xf32> to vector<4x16xf32>
    %c0_2 = arith.constant 0 : index
    %c0_3 = arith.constant 0 : index
    %2 = vector.load %arg3[%c0_2, %c0_3] : memref<32x4xf32, #tpu.memory_space<vmem>>, vector<32x4xf32>
    %cst = arith.constant 0.000000e+00 : f32
    %3 = vector.broadcast %cst : f32 to vector<32x16xf32>
    %4 = vector.extract_strided_slice %2 {offsets = [0, 0], sizes = [32, 1], strides = [1, 1]} : vector<32x4xf32> to vector<32x1xf32>
    %5 = vector.extract_strided_slice %1 {offsets = [0, 0], sizes = [1, 16], strides = [1, 1]} : vector<4x16xf32> to vector<1x16xf32>
    %6 = vector.broadcast %4 : vector<32x1xf32> to vector<32x16xf32>
    %7 = vector.broadcast %5 : vector<1x16xf32> to vector<32x16xf32>
    %8 = arith.mulf %6, %7 : vector<32x16xf32>
    %9 = arith.addf %3, %8 : vector<32x16xf32>
    %10 = vector.extract_strided_slice %2 {offsets = [0, 1], sizes = [32, 1], strides = [1, 1]} : vector<32x4xf32> to vector<32x1xf32>
    %11 = vector.extract_strided_slice %1 {offsets = [1, 0], sizes = [1, 16], strides = [1, 1]} : vector<4x16xf32> to vector<1x16xf32>
    %12 = vector.broadcast %10 : vector<32x1xf32> to vector<32x16xf32>
    %13 = vector.broadcast %11 : vector<1x16xf32> to vector<32x16xf32>
    %14 = arith.mulf %12, %13 : vector<32x16xf32>
    %15 = arith.addf %9, %14 : vector<32x16xf32>
    %16 = vector.extract_strided_slice %2 {offsets = [0, 2], sizes = [32, 1], strides = [1, 1]} : vector<32x4xf32> to vector<32x1xf32>
    %17 = vector.extract_strided_slice %1 {offsets = [2, 0], sizes = [1, 16], strides = [1, 1]} : vector<4x16xf32> to vector<1x16xf32>
    %18 = vector.broadcast %16 : vector<32x1xf32> to vector<32x16xf32>
    %19 = vector.broadcast %17 : vector<1x16xf32> to vector<32x16xf32>
    %20 = arith.mulf %18, %19 : vector<32x16xf32>
    %21 = arith.addf %15, %20 : vector<32x16xf32>
    %22 = vector.extract_strided_slice %2 {offsets = [0, 3], sizes = [32, 1], strides = [1, 1]} : vector<32x4xf32> to vector<32x1xf32>
    %23 = vector.extract_strided_slice %1 {offsets = [3, 0], sizes = [1, 16], strides = [1, 1]} : vector<4x16xf32> to vector<1x16xf32>
    %24 = vector.broadcast %22 : vector<32x1xf32> to vector<32x16xf32>
    %25 = vector.broadcast %23 : vector<1x16xf32> to vector<32x16xf32>
    %26 = arith.mulf %24, %25 : vector<32x16xf32>
    %27 = arith.addf %21, %26 : vector<32x16xf32>
    %c0_4 = arith.constant 0 : index
    %c0_5 = arith.constant 0 : index
    %28 = vector.load %arg4[%c0_4, %c0_5] : memref<32x1xf32, #tpu.memory_space<vmem>>, vector<32x1xf32>
    %29 = vector.broadcast %28 : vector<32x1xf32> to vector<32x16xf32>
    %30 = arith.addf %27, %29 : vector<32x16xf32>
    %cst_6 = arith.constant 5.000000e-01 : f32
    %31 = vector.broadcast %cst_6 : f32 to vector<32x16xf32>
    %32 = arith.mulf %31, %30 : vector<32x16xf32>
    %cst_7 = arith.constant 0.707106769 : f32
    %33 = vector.broadcast %cst_7 : f32 to vector<32x16xf32>
    %34 = arith.mulf %30, %33 : vector<32x16xf32>
    %35 = math.erf %34 : vector<32x16xf32>
    %cst_8 = arith.constant 1.000000e+00 : f32
    %36 = vector.broadcast %cst_8 : f32 to vector<32x16xf32>
    %37 = arith.addf %36, %35 : vector<32x16xf32>
    %38 = arith.mulf %32, %37 : vector<32x16xf32>
    %39 = tpu.transpose %38, [1, 0] : vector<32x16xf32> -> vector<16x32xf32>
    %c0_9 = arith.constant 0 : index
    %c0_10 = arith.constant 0 : index
    %c0_11 = arith.constant 0 : index
    %40 = vector.load %arg5[%c0_9, %c0_10, %c0_11] : memref<1x16x32xf32, #tpu.memory_space<vmem>>, vector<1x16x32xf32>
    %41 = vector.shape_cast %40 : vector<1x16x32xf32> to vector<16x32xf32>
    %42 = vector.shape_cast %39 : vector<16x32xf32> to vector<1x16x32xf32>
    tpu.vector_store %arg5[%c0_9, %c0_10, %c0_11], %42 {strides = array<i32>} : memref<1x16x32xf32, #tpu.memory_space<vmem>>, vector<1x16x32xf32>,
    return
  }
  func.func @transform_0(%arg0: i32, %arg1: i32) -> (i32, i32, i32) {
    %c0_i32 = arith.constant 0 : i32
    %c0_i32_0 = arith.constant 0 : i32
    return %arg0, %c0_i32, %arg1 : i32, i32, i32
  }
  func.func @transform_1(%arg0: i32, %arg1: i32) -> (i32, i32) {
    %c0_i32 = arith.constant 0 : i32
    %c0_i32_0 = arith.constant 0 : i32
    %c0_i32_1 = arith.constant 0 : i32
    return %c0_i32, %c0_i32_0 : i32, i32
  }
  func.func @transform_2(%arg0: i32, %arg1: i32) -> (i32, i32) {
    %c0_i32 = arith.constant 0 : i32
    %c0_i32_0 = arith.constant 0 : i32
    %c0_i32_1 = arith.constant 0 : i32
    return %c0_i32, %c0_i32_0 : i32, i32
  }
  func.func @transform_3(%arg0: i32, %arg1: i32) -> (i32, i32, i32) {
    %c0_i32 = arith.constant 0 : i32
    %c0_i32_0 = arith.constant 0 : i32
    return %arg0, %arg1, %c0_i32 : i32, i32, i32
  }
}

</mosaic_0001>

<llo_original>
// kernel: tpu_custom_call.1
$region0: #{tpu_custom_call.1}
  #allocation0 [shape = 'u32[]', space=smem, size = 0x4, offset = 0x4, fixed_abs, tag = 'smem constant byte address 0x4 - core index']
  #allocation1 [shape = 'u32[144,128]{1,0:T(1,128)}', space=vmem, size = 0x12000, scoped, tag = 'internal scratch']
  %s0 = inlined_call_operand.vmem [shape: f32[2,4,16], index: 0, kind: input, shape index: {}]
  %s1 = inlined_call_operand.vmem [shape: f32[32,4], index: 1, kind: input, shape index: {}]
  %s2 = inlined_call_operand.vmem [shape: f32[32,1], index: 2, kind: input, shape index: {}]
  %s3 = inlined_call_operand.hbm [shape: f32[2,16,32], index: 3, kind: output, shape index: {}]
  %s4 = sld [smem:[#allocation0]]
  $region45: #{tpu_custom_call.1} parent=0
    _
  %s6 = ssub.s32 1, %s4
  %s7 = scalar_select 0, %s6, %s4
  $region1: #{tpu_custom_call.1} parent=0
    #allocation2 [shape = 'u8[16384]{0}', space=vmem, size = 0x4000, scoped, tag = 'output window, operand 0']
    #allocation3 [shape = 's32[2]{0}', space=sflag, size = 0x8, scoped, tag = 'scoped memory for tpu_custom_call.1']
    %8 = vsyncpa [#allocation3], 0
    %s9 = scalar_lea.sflag [#allocation3], 1
    %10 = vsyncpa %s9, 0
    loop: start=0, step=1, limit=4
    $region2: #{tpu_custom_call.1} parent=1 // loop_pre_header
      _
    $region3: #{tpu_custom_call.1} parent=1 // loop_header
      %s12 = sphi 0, %s16
      %p13 = scmp.ge.s32.totalorder %s12, 4
      %s19 = sphi 0, %s31
      %s20 = sphi 0, %s27
      %s21 = sphi 0, %s19
      %s22 = sphi 0, %s20
      %s23 = sphi 0, %s21
      %s24 = sphi 0, %s22
      %s36 = sphi 0, %s38
      %s39 = sphi 0, %s36
      %s40 = sphi 0, %s39
      %s56 = sphi 0, %s40
      %s60 = sphi 0, %s60
      %s62 = sphi 0, %s60
      %s63 = sphi 0, %s62
      %s77 = sphi 0, %s63
      %s81 = sphi 0, %s81
      %s83 = sphi 0, %s81
      %s84 = sphi 0, %s83
      %s98 = sphi 0, %s84
      %s106 = sphi 0, %s108
      %s109 = sphi 0, %s106
      %s110 = sphi 0, %s109
      %s126 = sphi 0, %s110
    $region4: #{tpu_custom_call.1} parent=1 // loop_header_branch
      %15 = sbr.rel (%p13) target = $region8
    $region5: #{tpu_custom_call.1} parent=1 // loop_body
      %s17 = ssub.s32 %s12, 1
      %s18 = ssub.s32 %s12, 2
      %s25 = sadd.s32 1, %s20
      %p26 = scmp.ge.s32.totalorder %s25, 1
      %s27 = scalar_select %p26, 0, %s25
      %s28 = sadd.s32 1, %s19
      %s29 = scalar_select %p26, %s28, %s19
      %p30 = scmp.ge.s32.totalorder %s29, 2
      %s31 = scalar_select %p30, 0, %s29
      %s32 = ssub.s32 %s19, %s31
      %s33 = ssub.s32 %s20, %s27
      %s34 = sor.u32 %s32, %s33
      %p35 = scmp.eq.s32.totalorder %s34, 0
      %s37 = sadd.s32 %s36, 1
      %s38 = scalar_select %p35, %s36, %s37
      %p41 = pneg %p35
      %p42 = scmp.eq.s32.totalorder %s12, 1
      %p43 = por %p41, %p42
      %p44 = scmp.ne.s32.totalorder %s36, %s39
      %p45 = scmp.eq.s32.totalorder %s12, 0
      %p46 = por %p44, %p45
      %p47 = scmp.ne.s32.totalorder %s36, %s39
      %p48 = scmp.eq.s32.totalorder %s17, 1
      %p49 = por %p47, %p48
      %p50 = scmp.ne.s32.totalorder %s39, %s40
      %p51 = scmp.eq.s32.totalorder %s17, 0
      %p52 = por %p50, %p51
      %p53 = scmp.ne.s32.totalorder %s39, %s40
      %p54 = scmp.eq.s32.totalorder %s18, 1
      %p55 = por %p53, %p54
      %p57 = scmp.ne.s32.totalorder %s40, %s56
      %p58 = scmp.eq.s32.totalorder %s18, 0
      %p59 = por %p57, %p58
      %s61 = sadd.s32 %s60, 1
      %p64 = scmp.eq.s32.totalorder %s12, 1
      %p65 = scmp.ne.s32.totalorder %s60, %s62
      %p66 = scmp.eq.s32.totalorder %s12, 0
      %p67 = por %p65, %p66
      %p68 = scmp.ne.s32.totalorder %s60, %s62
      %p69 = scmp.eq.s32.totalorder %s17, 1
      %p70 = por %p68, %p69
      %p71 = scmp.ne.s32.totalorder %s62, %s63
      %p72 = scmp.eq.s32.totalorder %s17, 0
      %p73 = por %p71, %p72
      %p74 = scmp.ne.s32.totalorder %s62, %s63
      %p75 = scmp.eq.s32.totalorder %s18, 1
      %p76 = por %p74, %p75
      %p78 = scmp.ne.s32.totalorder %s63, %s77
      %p79 = scmp.eq.s32.totalorder %s18, 0
      %p80 = por %p78, %p79
      %s82 = sadd.s32 %s81, 1
      %p85 = scmp.eq.s32.totalorder %s12, 1
      %p86 = scmp.ne.s32.totalorder %s81, %s83
      %p87 = scmp.eq.s32.totalorder %s12, 0
      %p88 = por %p86, %p87
      %p89 = scmp.ne.s32.totalorder %s81, %s83
      %p90 = scmp.eq.s32.totalorder %s17, 1
      %p91 = por %p89, %p90
      %p92 = scmp.ne.s32.totalorder %s83, %s84
      %p93 = scmp.eq.s32.totalorder %s17, 0
      %p94 = por %p92, %p93
      %p95 = scmp.ne.s32.totalorder %s83, %s84
      %p96 = scmp.eq.s32.totalorder %s18, 1
      %p97 = por %p95, %p96
      %p99 = scmp.ne.s32.totalorder %s84, %s98
      %p100 = scmp.eq.s32.totalorder %s18, 0
      %p101 = por %p99, %p100
      %s102 = ssub.s32 %s19, %s31
      %s103 = ssub.s32 %s20, %s27
      %s104 = sor.u32 %s102, %s103
      %p105 = scmp.eq.s32.totalorder %s104, 0
      %s107 = sadd.s32 %s106, 1
      %s108 = scalar_select %p105, %s106, %s107
      %p111 = pneg %p105
      %p112 = scmp.eq.s32.totalorder %s12, 1
      %p113 = por %p111, %p112
      %p114 = scmp.ne.s32.totalorder %s106, %s109
      %p115 = scmp.eq.s32.totalorder %s12, 0
      %p116 = por %p114, %p115
      %p117 = scmp.ne.s32.totalorder %s106, %s109
      %p118 = scmp.eq.s32.totalorder %s17, 1
      %p119 = por %p117, %p118
      %p120 = scmp.ne.s32.totalorder %s109, %s110
      %p121 = scmp.eq.s32.totalorder %s17, 0
      %p122 = por %p120, %p121
      %p123 = scmp.ne.s32.totalorder %s109, %s110
      %p124 = scmp.eq.s32.totalorder %s18, 1
      %p125 = por %p123, %p124
      %p127 = scmp.ne.s32.totalorder %s110, %s126
      %p128 = scmp.eq.s32.totalorder %s18, 0
      %p129 = por %p127, %p128
      %p130 = scmp.le.s32.totalorder 1, %s12
      %p131 = scmp.lt.s32.totalorder %s12, 3
      %p132 = pnand %p130, %p131
      %p133 = pneg %p132
      // Predicated region
      $region9: #{tpu_custom_call.1} parent=5 // pred_check
        _
      $region10: #{tpu_custom_call.1} parent=5 // pred_check_branch
        %135 = sbr.rel (%p132) target = $region12
      $region11: #{tpu_custom_call.1} parent=5 // pred_region
        %s136 = ssub.s32 %s12, 1
        // Predicated region
        $region13: #{tpu_custom_call.1} parent=11 // pred_check
          %p137 = pneg %p73
        $region14: #{tpu_custom_call.1} parent=11 // pred_check_branch
          %139 = sbr.rel (%p137) target = $region16
        $region15: #{tpu_custom_call.1} parent=11 // pred_region
          _
        $region16: #{tpu_custom_call.1} parent=11 // pred_fallthru
          _
        // Predicated region
        $region17: #{tpu_custom_call.1} parent=11 // pred_check
          %p140 = pneg %p94
        $region18: #{tpu_custom_call.1} parent=11 // pred_check_branch
          %142 = sbr.rel (%p140) target = $region20
        $region19: #{tpu_custom_call.1} parent=11 // pred_region
          _
        $region20: #{tpu_custom_call.1} parent=11 // pred_fallthru
          _
      $region12: #{tpu_custom_call.1} parent=5 // pred_fallthru
        _
      %p143 = scmp.lt.s32.totalorder %s12, 2
      // Predicated region
      $region21: #{tpu_custom_call.1} parent=5 // pred_check
        %p144 = pneg %p143
      $region22: #{tpu_custom_call.1} parent=5 // pred_check_branch
        %146 = sbr.rel (%p144) target = $region24
      $region23: #{tpu_custom_call.1} parent=5 // pred_region
        // Predicated region
        $region25: #{tpu_custom_call.1} parent=23 // pred_check
          %p147 = pneg %p46
        $region26: #{tpu_custom_call.1} parent=23 // pred_check_branch
          %149 = sbr.rel (%p147) target = $region28
        $region27: #{tpu_custom_call.1} parent=23 // pred_region
          %p150 = scmp.lt.s32.totalorder %s19, 1
          %s151 = scalar_select %p150, %s19, 1
          %p152 = scmp.lt.s32.totalorder %s20, 0
          %s153 = scalar_select %p152, %s20, 0
          %s154 = sadd.s32 %s153, %s151
          %s155 = smul.addr %s154, 4
          %s156 = scalar_lea.vmem %s0, %s155
        $region28: #{tpu_custom_call.1} parent=23 // pred_fallthru
          _
      $region24: #{tpu_custom_call.1} parent=5 // pred_fallthru
        _
      %p157 = scmp.le.s32.totalorder 1, %s12
      %p158 = scmp.lt.s32.totalorder %s12, 3
      %p159 = pnand %p157, %p158
      %p160 = pneg %p159
      // Predicated region
      $region29: #{tpu_custom_call.1} parent=5 // pred_check
        _
      $region30: #{tpu_custom_call.1} parent=5 // pred_check_branch
        %162 = sbr.rel (%p159) target = $region32
      $region31: #{tpu_custom_call.1} parent=5 // pred_region
        %s163 = ssub.s32 %s12, 1
        %p164 = scmp.lt.s32.totalorder %s21, 1
        %s165 = scalar_select %p164, %s21, 1
        %p166 = scmp.lt.s32.totalorder %s22, 0
        %s167 = scalar_select %p166, %s22, 0
        %s168 = sadd.s32 %s167, %s165
        %s169 = smul.addr %s168, 4
        %s170 = scalar_lea.vmem %s0, %s169
        %p171 = pneg %p52
        %p172 = pneg %p49
        %p173 = pneg %p73
        %p174 = pneg %p70
        %p175 = pneg %p94
        %p176 = pneg %p91
        %p177 = pneg %p122
        %p178 = pneg %p119
        %s179 = sand.u32 %s109, 1
        %s180 = scalar_lea.sflag [#allocation3], %s179
        %s181 = sand.u32 %s109, 1
        %s182 = smul.addr %s181, 16
        %s183 = scalar_lea.vmem [#allocation2], %s182
        %p184 = scmp.lt.s32.totalorder %s21, 1
        %s185 = scalar_select %p184, %s21, 1
        %p186 = scmp.lt.s32.totalorder %s22, 0
        %s187 = scalar_select %p186, %s22, 0
        %s188 = sadd.s32 %s187, %s185
        %s189 = smul.addr %s188, 4
        %s190 = scalar_lea.vmem %s0, %s189
        %s191 = smul.u32 2, %s22
        %v192 = vld [vmem:[%s190] sm:$0xf]
        %v193 = vld [vmem:[%s1] sm:$0xff]
        %v194 = vld [vmem:[%s1 + $0x8] sm:$0xff]
        %v195 = vld [vmem:[%s1 + $0x10] sm:$0xff]
        %v196 = vld [vmem:[%s1 + $0x18] sm:$0xff]
        %198 = vset.pattern.permute.xlu0 0
        %199 = vperm.xlu0 %198, %v193
        %v200 = vpop.permute.xlu0 %199
        %203 = vset.pattern.permute.xlu0 0
        %204 = vperm.xlu0 %203, %v194
        %v205 = vpop.permute.xlu0 %204
        %208 = vset.pattern.permute.xlu0 0
        %209 = vperm.xlu0 %208, %v195
        %v210 = vpop.permute.xlu0 %209
        %213 = vset.pattern.permute.xlu0 0
        %214 = vperm.xlu0 %213, %v196
        %v215 = vpop.permute.xlu0 %214
        %v217 = vlaneseq
        %v218 = vshrl.u32 %v217, 7
        %v219 = vsub.s32 0, %v218
        %v220 = vrot.slane %v192, %v219
        %v221 = vmul.f32 %v200, %v220
        %v222 = vmul.f32 %v205, %v220
        %v223 = vmul.f32 %v210, %v220
        %v224 = vmul.f32 %v215, %v220
        %v225 = vadd.f32 %v221, 0.0
        %v226 = vadd.f32 %v222, 0.0
        %v227 = vadd.f32 %v223, 0.0
        %v228 = vadd.f32 %v224, 0.0
        %229 = vset.pattern.permute.xlu0 1
        %230 = vperm.xlu0 %229, %v193
        %v231 = vpop.permute.xlu0 %230
        %233 = vset.pattern.permute.xlu0 1
        %234 = vperm.xlu0 %233, %v194
        %v235 = vpop.permute.xlu0 %234
        %237 = vset.pattern.permute.xlu0 1
        %238 = vperm.xlu0 %237, %v195
        %v239 = vpop.permute.xlu0 %238
        %241 = vset.pattern.permute.xlu0 1
        %242 = vperm.xlu0 %241, %v196
        %v243 = vpop.permute.xlu0 %242
        %v245 = vlaneseq
        %v246 = vshrl.u32 %v245, 7
        %v247 = vsub.s32 1, %v246
        %v248 = vrot.slane %v192, %v247
        %v249 = vmul.f32 %v231, %v248
        %v250 = vmul.f32 %v235, %v248
        %v251 = vmul.f32 %v239, %v248
        %v252 = vmul.f32 %v243, %v248
        %v253 = vadd.f32 %v225, %v249
        %v254 = vadd.f32 %v226, %v250
        %v255 = vadd.f32 %v227, %v251
        %v256 = vadd.f32 %v228, %v252
        %257 = vset.pattern.permute.xlu0 2
        %258 = vperm.xlu0 %257, %v193
        %v259 = vpop.permute.xlu0 %258
        %261 = vset.pattern.permute.xlu0 2
        %262 = vperm.xlu0 %261, %v194
        %v263 = vpop.permute.xlu0 %262
        %265 = vset.pattern.permute.xlu0 2
        %266 = vperm.xlu0 %265, %v195
        %v267 = vpop.permute.xlu0 %266
        %269 = vset.pattern.permute.xlu0 2
        %270 = vperm.xlu0 %269, %v196
        %v271 = vpop.permute.xlu0 %270
        %v273 = vlaneseq
        %v274 = vshrl.u32 %v273, 7
        %v275 = vsub.s32 2, %v274
        %v276 = vrot.slane %v192, %v275
        %v277 = vmul.f32 %v259, %v276
        %v278 = vmul.f32 %v263, %v276
        %v279 = vmul.f32 %v267, %v276
        %v280 = vmul.f32 %v271, %v276
        %v281 = vadd.f32 %v253, %v277
        %v282 = vadd.f32 %v254, %v278
        %v283 = vadd.f32 %v255, %v279
        %v284 = vadd.f32 %v256, %v280
        %285 = vset.pattern.permute.xlu0 3
        %286 = vperm.xlu0 %285, %v193
        %v287 = vpop.permute.xlu0 %286
        %289 = vset.pattern.permute.xlu0 3
        %290 = vperm.xlu0 %289, %v194
        %v291 = vpop.permute.xlu0 %290
        %293 = vset.pattern.permute.xlu0 3
        %294 = vperm.xlu0 %293, %v195
        %v295 = vpop.permute.xlu0 %294
        %297 = vset.pattern.permute.xlu0 3
        %298 = vperm.xlu0 %297, %v196
        %v299 = vpop.permute.xlu0 %298
        %v301 = vlaneseq
        %v302 = vshrl.u32 %v301, 7
        %v303 = vsub.s32 3, %v302
        %v304 = vrot.slane %v192, %v303
        %v305 = vmul.f32 %v287, %v304
        %v306 = vmul.f32 %v291, %v304
        %v307 = vmul.f32 %v295, %v304
        %v308 = vmul.f32 %v299, %v304
        %v309 = vadd.f32 %v281, %v305
        %v310 = vadd.f32 %v282, %v306
        %v311 = vadd.f32 %v283, %v307
        %v312 = vadd.f32 %v284, %v308
        %v313 = vld [vmem:[%s2] sm:$0xff]
        %v314 = vld [vmem:[%s2 + $0x8] sm:$0xff]
        %v315 = vld [vmem:[%s2 + $0x10] sm:$0xff]
        %v316 = vld [vmem:[%s2 + $0x18] sm:$0xff]
        %318 = vset.pattern.permute.xlu0 0
        %319 = vperm.xlu0 %318, %v313
        %v320 = vpop.permute.xlu0 %319
        %323 = vset.pattern.permute.xlu0 0
        %324 = vperm.xlu0 %323, %v314
        %v325 = vpop.permute.xlu0 %324
        %328 = vset.pattern.permute.xlu0 0
        %329 = vperm.xlu0 %328, %v315
        %v330 = vpop.permute.xlu0 %329
        %333 = vset.pattern.permute.xlu0 0
        %334 = vperm.xlu0 %333, %v316
        %v335 = vpop.permute.xlu0 %334
        %v337 = vadd.f32 %v309, %v320
        %v338 = vadd.f32 %v310, %v325
        %v339 = vadd.f32 %v311, %v330
        %v340 = vadd.f32 %v312, %v335
        %v341 = vmul.f32 %v337, 0.5
        %v342 = vmul.f32 %v338, 0.5
        %v343 = vmul.f32 %v339, 0.5
        %v344 = vmul.f32 %v340, 0.5
        %v345 = vmul.f32 %v337, 0.70710677
        %v346 = vmul.f32 %v338, 0.70710677
        %v347 = vmul.f32 %v339, 0.70710677
        %v348 = vmul.f32 %v340, 0.70710677
        %v349 = verf.f32.pop %v345
        %v350 = verf.f32.pop %v346
        %v351 = verf.f32.pop %v347
        %v352 = verf.f32.pop %v348
        %v353 = vadd.f32 %v349, 1.0
        %v354 = vadd.f32 %v350, 1.0
        %v355 = vadd.f32 %v351, 1.0
        %v356 = vadd.f32 %v352, 1.0
        %v357 = vmul.f32 %v341, %v353
        %v358 = vmul.f32 %v342, %v354
        %v359 = vmul.f32 %v343, %v355
        %v360 = vmul.f32 %v344, %v356
        %361 = vxpose.xlu0.b32.start [1/16] %v357, 128
        %362 = vxpose.xlu0.b32.cont [2/16] %v358, 128
        %363 = vxpose.xlu0.b32.cont [3/16] %v359, 128
        %364 = vxpose.xlu0.b32.cont [4/16] %v360, 128
        %365 = vxpose.xlu0.b32.cont [5/16] 0.0, 128
        %366 = vxpose.xlu0.b32.cont [6/16] 0.0, 128
        %367 = vxpose.xlu0.b32.cont [7/16] 0.0, 128
        %368 = vxpose.xlu0.b32.cont [8/16] 0.0, 128
        %369 = vxpose.xlu0.b32.cont [9/16] 0.0, 128
        %370 = vxpose.xlu0.b32.cont [10/16] 0.0, 128
        %371 = vxpose.xlu0.b32.cont [11/16] 0.0, 128
        %372 = vxpose.xlu0.b32.cont [12/16] 0.0, 128
        %373 = vxpose.xlu0.b32.cont [13/16] 0.0, 128
        %374 = vxpose.xlu0.b32.cont [14/16] 0.0, 128
        %375 = vxpose.xlu0.b32.cont [15/16] 0.0, 128
        %376 = vxpose.xlu0.b32.end [16/16] 0.0, 128
        %v377 = vpop.trf.xlu0
        %v378 = vpop.trf.xlu0
        %v379 = vpop.trf.xlu0
        %v380 = vpop.trf.xlu0
        %v381 = vpop.trf.xlu0
        %v382 = vpop.trf.xlu0
        %v383 = vpop.trf.xlu0
        %v384 = vpop.trf.xlu0
        %v385 = vpop.trf.xlu0
        %v386 = vpop.trf.xlu0
        %v387 = vpop.trf.xlu0
        %v388 = vpop.trf.xlu0
        %v389 = vpop.trf.xlu0
        %v390 = vpop.trf.xlu0
        %v391 = vpop.trf.xlu0
        %v392 = vpop.trf.xlu0
        %vm393 = vcmask 261120
        %394 = vst.msk [vmem:[%s183] sm:$0xff] %vm393, %v377
        %395 = vst.msk [vmem:[%s183 + $0x8] sm:$0xff] %vm393, %v378
        %s396 = sand.u32 %s109, 1
        %s397 = scalar_lea.sflag [#allocation3], %s396
        %s398 = sand.u32 %s109, 1
        %s399 = smul.addr %s398, 16
        %s400 = scalar_lea.vmem [#allocation2], %s399
        // Predicated region
        $region33: #{tpu_custom_call.1} parent=31 // pred_check
          %p401 = pneg %p119
        $region34: #{tpu_custom_call.1} parent=31 // pred_check_branch
          %403 = sbr.rel (%p401) target = $region36
        $region35: #{tpu_custom_call.1} parent=31 // pred_region
          %s404 = smul.u32 2, %s22
          %s406 = ssub.s32 256, 256
          %407 = vsyncadd %s397, %s406
          %s408 = smul.addr %s21, 2
          %s409 = sadd.s32 %s404, %s408
          %s410 = smul.addr %s409, 128
          %s411 = scalar_lea.hbm %s3, %s410
          %s412 = sshll.u32 %s400, 4
          %s413 = int_to_ptr.vmem [resolvable:$true] %s412
          %418 = dma.vmem_to_hbm [thread:$0]  %s413, 256, %s411, %s397, 128, 128, 8
        $region36: #{tpu_custom_call.1} parent=31 // pred_fallthru
          _
      $region32: #{tpu_custom_call.1} parent=5 // pred_fallthru
        _
      %p419 = scmp.le.s32.totalorder 2, %s12
      // Predicated region
      $region37: #{tpu_custom_call.1} parent=5 // pred_check
        %p420 = pneg %p419
      $region38: #{tpu_custom_call.1} parent=5 // pred_check_branch
        %422 = sbr.rel (%p420) target = $region40
      $region39: #{tpu_custom_call.1} parent=5 // pred_region
        %s423 = ssub.s32 %s12, 2
        // Predicated region
        $region41: #{tpu_custom_call.1} parent=39 // pred_check
          %p424 = pneg %p125
        $region42: #{tpu_custom_call.1} parent=39 // pred_check_branch
          %426 = sbr.rel (%p424) target = $region44
        $region43: #{tpu_custom_call.1} parent=39 // pred_region
          %s427 = sand.u32 %s110, 1
          %s428 = scalar_lea.sflag [#allocation3], %s427
          %s429 = sand.u32 %s110, 1
          %s430 = smul.addr %s429, 16
          %s431 = scalar_lea.vmem [#allocation2], %s430
          %432 = dma.done %s428, 256
        $region44: #{tpu_custom_call.1} parent=39 // pred_fallthru
          _
      $region40: #{tpu_custom_call.1} parent=5 // pred_fallthru
        _
    $region6: #{tpu_custom_call.1} parent=1 // loop_footer
      %s16 = sadd.s32 1, %s12
    $region7: #{tpu_custom_call.1} parent=1 // loop_footer_branch
      %11 = sbr.rel target = $region3
    $region8: #{tpu_custom_call.1} parent=1 // loop_exit
      _
    %433 = vsyncpa [#allocation3], 1
    %s434 = scalar_lea.sflag [#allocation3], 1
    %435 = vsyncpa %s434, 1

</llo_original>
